<compile_context>
chip_gen: v7x
topology: tpu7x:2x2x1
jax: 0.10.0
libtpu: 0.0.40
codegen_flags: <defaults>
</compile_context>

<pallas_src>
import functools
import math

import jax
import jax.numpy as jnp
from jax import lax
from jax.experimental import pallas as pl
from jax.experimental.pallas import tpu as pltpu

EPS = 1e-5                          # matches the custom LayerNorm in the reference
_SQRT_2_OVER_PI = math.sqrt(2.0 / math.pi)
_NEG_INF = -1e30                    # finite "minus infinity" (avoids inf arithmetic)
_NT = (((1,), (1,)), ((), ()))      # contract last dims of both operands (A @ B^T)


# ---------------------------------------------------------------------------
# small helpers
# ---------------------------------------------------------------------------
def _layernorm(x, scale, shift):
    mean = jnp.mean(x, axis=-1, keepdims=True)
    var = jnp.mean(jnp.square(x - mean), axis=-1, keepdims=True)   # unbiased=False
    return scale * ((x - mean) * lax.rsqrt(var + EPS)) + shift


def _gelu_tanh(x):
    return 0.5 * x * (1.0 + jnp.tanh(_SQRT_2_OVER_PI * (x + 0.044715 * x ** 3)))


def _pick_tile(n, pref):
    if n <= pref:
        return n
    for cand in (512, 256, 128, 64, 32, 16, 8):
        if cand <= pref and n % cand == 0:
            return cand
    return n   # TODO(synk): odd n > pref falls back to a single full-length block


@functools.lru_cache(maxsize=1)
def _single_buffer_ok():
    """Probe whether pipeline_mode=pl.Buffered(1) is supported (and correct)."""
    try:
        def k(x_ref, o_ref):
            o_ref[...] = x_ref[...] + 1.0

        x = jnp.arange(16 * 128, dtype=jnp.float32).reshape(16, 128)
        out = pl.pallas_call(
            k,
            out_shape=jax.ShapeDtypeStruct((16, 128), jnp.float32),
            grid=(2,),
            in_specs=[pl.BlockSpec((8, 128), lambda i: (i, 0),
                                   pipeline_mode=pl.Buffered(1))],
            out_specs=pl.BlockSpec((8, 128), lambda i: (i, 0)),
        )(x)
        return bool(jnp.allclose(jax.block_until_ready(out), x + 1.0))
    except Exception:
        return False


def _spec(block_shape, index_map, *, single=False):
    """BlockSpec; single=True asks for a single VMEM buffer (constant / slowly
    changing blocks such as weights, LN params, biases and full-seq K/V)."""
    if single and _single_buffer_ok():
        return pl.BlockSpec(block_shape, index_map, pipeline_mode=pl.Buffered(1))
    return pl.BlockSpec(block_shape, index_map)


@functools.lru_cache(maxsize=1)
def _vmem_budget():
    """(vmem_limit_bytes, preferred seq tile) - generation aware."""
    cap = None
    try:
        cap = getattr(pltpu.get_tpu_info(), "vmem_capacity_bytes", None)
    except Exception:
        cap = None
    if cap is not None and cap >= 100 * 2 ** 20:      # v5e / v6e class (128 MiB VMEM)
        return 100 * 2 ** 20, 512
    return 48 * 2 ** 20, 256                          # v7x class (64 MiB) / unknown


# ---------------------------------------------------------------------------
# pass 1: LayerNorm1 + fused QKV projection -> head-major bf16 q/k/v
# ---------------------------------------------------------------------------
def _make_qkv_kernel(n_heads, head_dim):
    d = n_heads * head_dim

    def kernel(x_ref, ln1s_ref, ln1b_ref, wqkv_ref, q_ref, k_ref, v_ref):
        h = _layernorm(x_ref[0], ln1s_ref[...], ln1b_ref[...])            # f32 VPU
        qkv = jnp.dot(h.astype(jnp.bfloat16), wqkv_ref[...],
                      preferred_element_type=jnp.float32).astype(jnp.bfloat16)
        # head-major outputs: each head becomes its own aligned (ts, hd) tile
        for h_i in range(n_heads):
            s0 = h_i * head_dim
            q_ref[0, h_i] = qkv[:, s0:s0 + head_dim]
            k_ref[0, h_i] = qkv[:, d + s0:d + s0 + head_dim]
            v_ref[0, h_i] = qkv[:, 2 * d + s0:2 * d + s0 + head_dim]

    return kernel


# ---------------------------------------------------------------------------
# pass 2: causal MHA (flash-style KV-tile loop) + out-proj + residual (+ FFN)
# ---------------------------------------------------------------------------
def _attention_x1(n_heads, head_dim, tq,
                  x_ref, q_ref, k_ref, v_ref, wproj_ref, bproj_ref, ctx_ref):
    """Causal MHA for one q tile, out-projection and residual-1. Returns (tq, D) f32."""
    scale = 1.0 / math.sqrt(head_dim)
    qi = pl.program_id(1)
    q0 = qi * tq
    nkv = qi + 1                     # causal: only KV tiles at/below the diagonal
    rows = q0 + lax.broadcasted_iota(jnp.int32, (tq, tq), 0)
    cols0 = lax.broadcasted_iota(jnp.int32, (tq, tq), 1)

    # Static loop over heads (ctx store stays a static lane slice); the heavy
    # (tq, tq) score/exp state lives inside the fori_loop body (bounded ranges).
    for h_i in range(n_heads):
        qh = q_ref[0, h_i]                                      # (tq, hd) bf16

        def kv_step(kv, carry, _h=h_i):
            m, l, acc = carry
            k0 = pl.multiple_of(kv * tq, tq)
            kh = k_ref[0, _h, pl.ds(k0, tq), :]                 # (tq, hd) bf16
            vh = v_ref[0, _h, pl.ds(k0, tq), :]
            s = lax.dot_general(qh, kh, _NT,
                                preferred_element_type=jnp.float32) * scale
            s = jnp.where(kv * tq + cols0 > rows, _NEG_INF, s)  # strictly-upper mask
            m_new = jnp.maximum(m, jnp.max(s, axis=-1, keepdims=True))
            alpha = jnp.exp(m - m_new)
            p = jnp.exp(s - m_new)
            l_new = alpha * l + jnp.sum(p, axis=-1, keepdims=True)
            acc_new = alpha * acc + jnp.dot(p.astype(jnp.bfloat16), vh,
                                            preferred_element_type=jnp.float32)
            return m_new, l_new, acc_new

        m0 = jnp.full((tq, 1), _NEG_INF, jnp.float32)
        l0 = jnp.zeros((tq, 1), jnp.float32)
        a0 = jnp.zeros((tq, head_dim), jnp.float32)
        _, l, acc = lax.fori_loop(0, nkv, kv_step, (m0, l0, a0))
        # TODO(synk): attention-weight dropout is identity (drop_rate=0 / eval).
        ctx_ref[:, h_i * head_dim:(h_i + 1) * head_dim] = (
            acc * pl.reciprocal(l, approx=True)).astype(jnp.bfloat16)

    # one K=D projection matmul (full MXU K-utilization), then residual 1
    att = jnp.dot(ctx_ref[...], wproj_ref[...],
                  preferred_element_type=jnp.float32) + bproj_ref[...]
    return att + x_ref[0]                                      # dropout = identity


def _make_attn_ffn_kernel(n_heads, head_dim, tq):
    """Pass-2 kernel with the FFN fused in (FFN weights fully resident in VMEM)."""
    def kernel(x_ref, q_ref, k_ref, v_ref, wproj_ref, bproj_ref,
               ln2s_ref, ln2b_ref, w1_ref, b1_ref, w2_ref, b2_ref,
               out_ref, ctx_ref):
        x1 = _attention_x1(n_heads, head_dim, tq,
                           x_ref, q_ref, k_ref, v_ref, wproj_ref, bproj_ref, ctx_ref)
        h = _layernorm(x1, ln2s_ref[...], ln2b_ref[...])
        h = jnp.dot(h.astype(jnp.bfloat16), w1_ref[...],
                    preferred_element_type=jnp.float32) + b1_ref[...]
        h = _gelu_tanh(h)
        h = jnp.dot(h.astype(jnp.bfloat16), w2_ref[...],
                    preferred_element_type=jnp.float32) + b2_ref[...]
        out_ref[0] = (h + x1).astype(out_ref.dtype)            # residual 2
    return kernel


def _make_attn_kernel(n_heads, head_dim, tq):
    """Pass-2 kernel when the FFN runs as its own hidden-tiled pass (v7x VMEM)."""
    def kernel(x_ref, q_ref, k_ref, v_ref, wproj_ref, bproj_ref,
               ln2s_ref, ln2b_ref, x1_ref, h2n_ref, ctx_ref):
        x1 = _attention_x1(n_heads, head_dim, tq,
                           x_ref, q_ref, k_ref, v_ref, wproj_ref, bproj_ref, ctx_ref)
        x1_ref[0] = x1
        h2n_ref[0] = _layernorm(x1, ln2s_ref[...], ln2b_ref[...]).astype(jnp.bfloat16)
    return kernel


# ---------------------------------------------------------------------------
# pass 3 (optional): hidden-tiled FeedForward + residual
# ---------------------------------------------------------------------------
def _ffn_kernel(h2n_ref, x1_ref, w1_ref, b1_ref, w2_ref, b2_ref, out_ref, acc_ref):
    j = pl.program_id(2)

    @pl.when(j == 0)
    def _():
        acc_ref[...] = jnp.zeros_like(acc_ref)

    h = jnp.dot(h2n_ref[0], w1_ref[...],
                preferred_element_type=jnp.float32) + b1_ref[...]
    h = _gelu_tanh(h)
    acc_ref[...] += jnp.dot(h.astype(jnp.bfloat16), w2_ref[...],
                            preferred_element_type=jnp.float32)

    @pl.when(j == pl.num_programs(2) - 1)
    def _():
        out_ref[0] = acc_ref[...] + b2_ref[...] + x1_ref[0]    # residual 2


# ---------------------------------------------------------------------------
# wrapper
# ---------------------------------------------------------------------------
def transformer_block(x, params, n_heads, *, tile_seq=None, tile_hidden=None,
                      split_ffn=None):
    (wq, wk, wv, wproj, bproj,
     ln1s, ln1b, ln2s, ln2b, w1, b1, w2, b2) = params
    B, T, D = x.shape
    head_dim = D // n_heads
    hidden = w1.shape[1]

    vmem_limit, pref_tile = _vmem_budget()
    ts = tile_seq if tile_seq is not None else _pick_tile(T, pref_tile)
    assert T % ts == 0
    tq = ts

    # one-time prep: fuse Q/K/V, store MXU-feeding weights as bf16
    wqkv = jnp.concatenate([wq, wk, wv], axis=1).astype(jnp.bfloat16)   # (D, 3D)
    wproj_bf = wproj.astype(jnp.bfloat16)
    w1_bf = w1.astype(jnp.bfloat16)
    w2_bf = w2.astype(jnp.bfloat16)
    # TODO(synk): on v7x, fp8 weight storage would further halve weight VMEM/DMA.

    if split_ffn is None:
        # stream the FFN through a hidden-tiled 3rd pass when keeping the full
        # bf16 (D,hidden)+(hidden,D) weights resident would crowd VMEM.
        split_ffn = (4 * D * hidden) > (vmem_limit // 4)

    def cparams(dims):
        return pltpu.CompilerParams(dimension_semantics=dims,
                                    vmem_limit_bytes=vmem_limit)

    # ---- pass 1: LN1 + fused QKV projection -> head-major bf16 q, k, v ------
    qkv_shape = jax.ShapeDtypeStruct((B, n_heads, T, head_dim), jnp.bfloat16)
    q, k, v = pl.pallas_call(
        _make_qkv_kernel(n_heads, head_dim),
        out_shape=(qkv_shape,) * 3,
        grid_spec=pltpu.PrefetchScalarGridSpec(
            num_scalar_prefetch=0,
            grid=(B, T // ts),
            in_specs=[
                pl.BlockSpec((1, ts, D), lambda b, t: (b, t, 0)),        # x tile
                _spec((1, D), lambda b, t: (0, 0), single=True),         # ln1 scale
                _spec((1, D), lambda b, t: (0, 0), single=True),         # ln1 shift
                _spec((D, 3 * D), lambda b, t: (0, 0), single=True),     # fused Wqkv
            ],
            out_specs=[pl.BlockSpec((1, n_heads, ts, head_dim),
                                    lambda b, t: (b, 0, t, 0))] * 3,
        ),
        compiler_params=cparams(("parallel", "parallel")),
        cost_estimate=pl.CostEstimate(
            flops=6 * B * T * D * D,
            transcendentals=0,
            bytes_accessed=4 * B * T * D + 6 * B * T * D + 6 * D * D),
    )(x, ln1s, ln1b, wqkv)

    # ---- pass 2: attention + projection + residual (+ fused FFN) ------------
    attn_in_specs = [
        pl.BlockSpec((1, tq, D), lambda b, i: (b, i, 0)),                # x shortcut
        pl.BlockSpec((1, n_heads, tq, head_dim), lambda b, i: (b, 0, i, 0)),  # q tile
        _spec((1, n_heads, T, head_dim), lambda b, i: (b, 0, 0, 0), single=True),  # K
        _spec((1, n_heads, T, head_dim), lambda b, i: (b, 0, 0, 0), single=True),  # V
        _spec((D, D), lambda b, i: (0, 0), single=True),                 # W_proj
        _spec((1, D), lambda b, i: (0, 0), single=True),                 # b_proj
        _spec((1, D), lambda b, i: (0, 0), single=True),                 # ln2 scale
        _spec((1, D), lambda b, i: (0, 0), single=True),                 # ln2 shift
    ]
    attn_scratch = [pltpu.VMEM((tq, D), jnp.bfloat16)]                   # per-head ctx

    if not split_ffn:
        return pl.pallas_call(
            _make_attn_ffn_kernel(n_heads, head_dim, tq),
            out_shape=jax.ShapeDtypeStruct((B, T, D), jnp.float32),
            grid_spec=pltpu.PrefetchScalarGridSpec(
                num_scalar_prefetch=0,
                grid=(B, T // tq),
                in_specs=attn_in_specs + [
                    _spec((D, hidden), lambda b, i: (0, 0), single=True),    # ff W1
                    _spec((1, hidden), lambda b, i: (0, 0), single=True),    # ff b1
                    _spec((hidden, D), lambda b, i: (0, 0), single=True),    # ff W2
                    _spec((1, D), lambda b, i: (0, 0), single=True),         # ff b2
                ],
                out_specs=pl.BlockSpec((1, tq, D), lambda b, i: (b, i, 0)),
                scratch_shapes=attn_scratch,
            ),
            compiler_params=cparams(("parallel", "parallel")),
            cost_estimate=pl.CostEstimate(
                flops=B * (2 * T * T * D + 2 * T * D * D + 4 * T * D * hidden),
                transcendentals=B * n_heads * T * T // 2 + B * T * hidden,
                bytes_accessed=14 * B * T * D + 2 * (D * D + 2 * D * hidden)),
        )(x, q, k, v, wproj_bf, bproj, ln2s, ln2b, w1_bf, b1, w2_bf, b2)

    x1, h2n = pl.pallas_call(
        _make_attn_kernel(n_heads, head_dim, tq),
        out_shape=(jax.ShapeDtypeStruct((B, T, D), jnp.float32),
                   jax.ShapeDtypeStruct((B, T, D), jnp.bfloat16)),
        grid_spec=pltpu.PrefetchScalarGridSpec(
            num_scalar_prefetch=0,
            grid=(B, T // tq),
            in_specs=attn_in_specs,
            out_specs=[pl.BlockSpec((1, tq, D), lambda b, i: (b, i, 0))] * 2,
            scratch_shapes=attn_scratch,
        ),
        compiler_params=cparams(("parallel", "parallel")),
        cost_estimate=pl.CostEstimate(
            flops=B * (2 * T * T * D + 2 * T * D * D),
            transcendentals=B * n_heads * T * T // 2,
            bytes_accessed=14 * B * T * D + 2 * D * D),
    )(x, q, k, v, wproj_bf, bproj, ln2s, ln2b)

    # ---- pass 3: hidden-tiled FFN + residual ---------------------------------
    th = tile_hidden if tile_hidden is not None else _pick_tile(hidden, 512)
    assert hidden % th == 0
    return pl.pallas_call(
        _ffn_kernel,
        out_shape=jax.ShapeDtypeStruct((B, T, D), jnp.float32),
        grid_spec=pltpu.PrefetchScalarGridSpec(
            num_scalar_prefetch=0,
            grid=(B, T // tq, hidden // th),
            in_specs=[
                pl.BlockSpec((1, tq, D), lambda b, i, j: (b, i, 0)),     # h2n (LN2(x1))
                pl.BlockSpec((1, tq, D), lambda b, i, j: (b, i, 0)),     # x1 shortcut
                pl.BlockSpec((D, th), lambda b, i, j: (0, j)),           # W1 col slab
                pl.BlockSpec((1, th), lambda b, i, j: (0, j)),           # b1 slab
                pl.BlockSpec((th, D), lambda b, i, j: (j, 0)),           # W2 row slab
                _spec((1, D), lambda b, i, j: (0, 0), single=True),      # b2
            ],
            out_specs=pl.BlockSpec((1, tq, D), lambda b, i, j: (b, i, 0)),
            scratch_shapes=[pltpu.VMEM((tq, D), jnp.float32)],
        ),
        compiler_params=pltpu.CompilerParams(
            dimension_semantics=("parallel", "parallel", "arbitrary"),
            vmem_limit_bytes=vmem_limit),
        cost_estimate=pl.CostEstimate(
            flops=4 * B * T * D * hidden,
            transcendentals=B * T * hidden,
            bytes_accessed=(B * T // tq) * 4 * D * hidden + 10 * B * T * D),
    )(h2n, x1, w1_bf, b1, w2_bf, b2)


# ------------------------- pure-JAX reference (f32) -------------------------
def reference_block(x, params, n_heads):
    (wq, wk, wv, wproj, bproj,
     ln1s, ln1b, ln2s, ln2b, w1, b1, w2, b2) = params
    B, T, D = x.shape
    hd = D // n_heads

    def ln(v, s, b):
        m = jnp.mean(v, -1, keepdims=True)
        var = jnp.mean((v - m) ** 2, -1, keepdims=True)
        return s * ((v - m) / jnp.sqrt(var + EPS)) + b

    shortcut = x
    h = ln(x, ln1s, ln1b)
    q = h @ wq
    k = h @ wk
    v = h @ wv
    mask = jnp.triu(jnp.ones((T, T), bool), 1)
    outs = []
    for i in range(n_heads):
        sl = slice(i * hd, (i + 1) * hd)
        s = jnp.einsum('btd,bsd->bts', q[..., sl], k[..., sl]) / math.sqrt(hd)
        s = jnp.where(mask, -jnp.inf, s)
        p = jax.nn.softmax(s, axis=-1)
        outs.append(jnp.einsum('bts,bsd->btd', p, v[..., sl]))
    ctx = jnp.concatenate(outs, axis=-1)
    h = ctx @ wproj + bproj
    x1 = h + shortcut
    h = ln(x1, ln2s, ln2b)
    h = h @ w1 + b1
    h = 0.5 * h * (1.0 + jnp.tanh(_SQRT_2_OVER_PI * (h + 0.044715 * h ** 3)))
    h = h @ w2 + b2
    return h + x1


# ------------------------------- main ---------------------------------------
if __name__ == "__main__":
    def make_params(key, D, hidden):
        ks = jax.random.split(key, 6)
        init = lambda k, shape: 0.02 * jax.random.normal(k, shape, jnp.float32)
        return (
            init(ks[0], (D, D)), init(ks[1], (D, D)), init(ks[2], (D, D)),   # Wq/Wk/Wv
            init(ks[3], (D, D)), jnp.zeros((1, D), jnp.float32),             # W_proj/b
            jnp.ones((1, D), jnp.float32), jnp.zeros((1, D), jnp.float32),   # ln1
            jnp.ones((1, D), jnp.float32), jnp.zeros((1, D), jnp.float32),   # ln2
            init(ks[4], (D, hidden)), jnp.zeros((1, hidden), jnp.float32),   # ff W1/b1
            init(ks[5], (hidden, D)), jnp.zeros((1, D), jnp.float32),        # ff W2/b2
        )

    k1, k2, k3, k4 = jax.random.split(jax.random.PRNGKey(0), 4)

    # config 1: the module's toy config (emb_dim=32, n_heads=4, context_length=8)
    B, T, D, H = 2, 8, 32, 4
    x = jax.random.normal(k1, (B, T, D), jnp.float32)
    params = make_params(k2, D, 4 * D)
    out = jax.block_until_ready(transformer_block(x, params, H))
    ref = reference_block(x, params, H)
    assert out.shape == (B, T, D)
    assert jnp.allclose(out, ref, atol=2e-2, rtol=2e-2), "config-1 mismatch vs reference"

    # config 2: tile-aligned shape exercising multi-tile causal skipping and the
    # hidden-tiled (split) FFN path.
    B, T, D, H = 2, 256, 128, 4
    x = jax.random.normal(k3, (B, T, D), jnp.float32)
    params = make_params(k4, D, 4 * D)
    out = jax.block_until_ready(
        transformer_block(x, params, H, tile_seq=128, tile_hidden=256, split_ffn=True))
    ref = reference_block(x, params, H)
    assert out.shape == (B, T, D)
    assert jnp.allclose(out, ref, atol=2e-2, rtol=2e-2), "config-2 mismatch vs reference"

    print("KERNEL_OK")
</pallas_src>

<mosaic_0001>
module attributes {stable_mosaic.version = 11 : i64} {
  func.func @k(%arg0: i32, %arg1: memref<8x128xf32, #tpu.memory_space<vmem>>, %arg2: memref<8x128xf32, #tpu.memory_space<vmem>>) attributes {dimension_semantics = [#tpu.dimension_semantics<arbitrary>], iteration_bounds = array<i64: 2>, scalar_prefetch = 0 : i64, scratch_operands = 0 : i64, tpu.core_type = #tpu.core_type<tc>, window_params = [{pipeline_mode = #tpu.pipeline_mode<synchronous>, transform_indices = @transform_0, window_bounds = array<i64: 8, 128>}, {transform_indices = @transform_1, window_bounds = array<i64: 8, 128>}]} {
    %c0 = arith.constant 0 : index
    %c0_0 = arith.constant 0 : index
    %0 = vector.load %arg1[%c0, %c0_0] : memref<8x128xf32, #tpu.memory_space<vmem>>, vector<8x128xf32>
    %cst = arith.constant 1.000000e+00 : f32
    %1 = vector.broadcast %cst : f32 to vector<8x128xf32>
    %2 = arith.addf %0, %1 : vector<8x128xf32>
    %c0_1 = arith.constant 0 : index
    %c0_2 = arith.constant 0 : index
    %3 = vector.load %arg2[%c0_1, %c0_2] : memref<8x128xf32, #tpu.memory_space<vmem>>, vector<8x128xf32>
    tpu.vector_store %arg2[%c0_1, %c0_2], %2 {strides = array<i32>} : memref<8x128xf32, #tpu.memory_space<vmem>>, vector<8x128xf32>,
    return
  }
  func.func @transform_0(%arg0: i32) -> (i32, i32) {
    %c0_i32 = arith.constant 0 : i32
    %c0_i32_0 = arith.constant 0 : i32
    return %arg0, %c0_i32 : i32, i32
  }
  func.func @transform_1(%arg0: i32) -> (i32, i32) {
    %c0_i32 = arith.constant 0 : i32
    %c0_i32_0 = arith.constant 0 : i32
    return %arg0, %c0_i32 : i32, i32
  }
}

module attributes {stable_mosaic.version = 11 : i64} {
  func.func @kernel(%arg0: i32, %arg1: i32, %arg2: memref<1x8x32xf32, #tpu.memory_space<vmem>>, %arg3: memref<1x32xf32, #tpu.memory_space<vmem>>, %arg4: memref<1x32xf32, #tpu.memory_space<vmem>>, %arg5: memref<32x96xbf16, #tpu.memory_space<vmem>>, %arg6: memref<1x4x8x8xbf16, #tpu.memory_space<vmem>>, %arg7: memref<1x4x8x8xbf16, #tpu.memory_space<vmem>>, %arg8: memref<1x4x8x8xbf16, #tpu.memory_space<vmem>>) attributes {dimension_semantics = [#tpu.dimension_semantics<parallel>, #tpu.dimension_semantics<parallel>], iteration_bounds = array<i64: 2, 1>, scalar_prefetch = 0 : i64, scratch_operands = 0 : i64, tpu.core_type = #tpu.core_type<tc>, window_params = [{transform_indices = @transform_0, window_bounds = array<i64: 1, 8, 32>}, {pipeline_mode = #tpu.pipeline_mode<synchronous>, transform_indices = @transform_1, window_bounds = array<i64: 1, 32>}, {pipeline_mode = #tpu.pipeline_mode<synchronous>, transform_indices = @transform_2, window_bounds = array<i64: 1, 32>}, {pipeline_mode = #tpu.pipeline_mode<synchronous>, transform_indices = @transform_3, window_bounds = array<i64: 32, 96>}, {transform_indices = @transform_4, window_bounds = array<i64: 1, 4, 8, 8>}, {transform_indices = @transform_5, window_bounds = array<i64: 1, 4, 8, 8>}, {transform_indices = @transform_6, window_bounds = array<i64: 1, 4, 8, 8>}]} {
    %c0 = arith.constant 0 : index
    %c0_0 = arith.constant 0 : index
    %c0_1 = arith.constant 0 : index
    %0 = vector.load %arg2[%c0, %c0_0, %c0_1] : memref<1x8x32xf32, #tpu.memory_space<vmem>>, vector<1x8x32xf32>
    %1 = vector.shape_cast %0 : vector<1x8x32xf32> to vector<8x32xf32>
    %c0_2 = arith.constant 0 : index
    %c0_3 = arith.constant 0 : index
    %2 = vector.load %arg3[%c0_2, %c0_3] : memref<1x32xf32, #tpu.memory_space<vmem>>, vector<1x32xf32>
    %c0_4 = arith.constant 0 : index
    %c0_5 = arith.constant 0 : index
    %3 = vector.load %arg4[%c0_4, %c0_5] : memref<1x32xf32, #tpu.memory_space<vmem>>, vector<1x32xf32>
    %cst = arith.constant dense<0.000000e+00> : vector<8xf32>
    %4 = vector.multi_reduction <add>, %1, %cst [1] : vector<8x32xf32> to vector<8xf32>
    %5 = vector.shape_cast %4 : vector<8xf32> to vector<8x1xf32>
    %cst_6 = arith.constant 3.200000e+01 : f32
    %6 = vector.broadcast %cst_6 : f32 to vector<8x1xf32>
    %7 = arith.divf %5, %6 : vector<8x1xf32>
    %8 = vector.broadcast %7 : vector<8x1xf32> to vector<8x32xf32>
    %9 = arith.subf %1, %8 : vector<8x32xf32>
    %10 = arith.mulf %9, %9 : vector<8x32xf32>
    %cst_7 = arith.constant dense<0.000000e+00> : vector<8xf32>
    %11 = vector.multi_reduction <add>, %10, %cst_7 [1] : vector<8x32xf32> to vector<8xf32>
    %12 = vector.shape_cast %11 : vector<8xf32> to vector<8x1xf32>
    %cst_8 = arith.constant 3.200000e+01 : f32
    %13 = vector.broadcast %cst_8 : f32 to vector<8x1xf32>
    %14 = arith.divf %12, %13 : vector<8x1xf32>
    %15 = vector.broadcast %7 : vector<8x1xf32> to vector<8x32xf32>
    %16 = arith.subf %1, %15 : vector<8x32xf32>
    %cst_9 = arith.constant 9.99999974E-6 : f32
    %17 = vector.broadcast %cst_9 : f32 to vector<8x1xf32>
    %18 = arith.addf %14, %17 : vector<8x1xf32>
    %19 = math.rsqrt %18 : vector<8x1xf32>
    %20 = vector.broadcast %19 : vector<8x1xf32> to vector<8x32xf32>
    %21 = arith.mulf %16, %20 : vector<8x32xf32>
    %22 = vector.broadcast %2 : vector<1x32xf32> to vector<8x32xf32>
    %23 = arith.mulf %22, %21 : vector<8x32xf32>
    %24 = vector.broadcast %3 : vector<1x32xf32> to vector<8x32xf32>
    %25 = arith.addf %23, %24 : vector<8x32xf32>
    %26 = arith.truncf %25 : vector<8x32xf32> to vector<8x32xbf16>
    %c0_10 = arith.constant 0 : index
    %c0_11 = arith.constant 0 : index
    %27 = vector.load %arg5[%c0_10, %c0_11] : memref<32x96xbf16, #tpu.memory_space<vmem>>, vector<32x96xbf16>
    %cst_12 = arith.constant dense<0.000000e+00> : vector<8x96xf32>
    %28 = tpu.matmul %26, %27, %cst_12 {dimension_numbers = #tpu.dot_dimension_numbers<[1], [0], [0], [1], [0, 0, 1, 1], [], []>} : vector<8x32xbf16>, vector<32x96xbf16>, vector<8x96xf32> -> vector<8x96xf32>
    %29 = arith.truncf %28 : vector<8x96xf32> to vector<8x96xbf16>
    %30 = vector.extract_strided_slice %29 {offsets = [0, 0], sizes = [8, 8], strides = [1, 1]} : vector<8x96xbf16> to vector<8x8xbf16>
    %c0_13 = arith.constant 0 : index
    %c0_14 = arith.constant 0 : index
    %c0_15 = arith.constant 0 : index
    %c0_16 = arith.constant 0 : index
    %31 = vector.load %arg6[%c0_13, %c0_14, %c0_15, %c0_16] : memref<1x4x8x8xbf16, #tpu.memory_space<vmem>>, vector<1x1x8x8xbf16>
    %32 = vector.shape_cast %31 : vector<1x1x8x8xbf16> to vector<8x8xbf16>
    %33 = vector.shape_cast %30 : vector<8x8xbf16> to vector<1x1x8x8xbf16>
    tpu.vector_store %arg6[%c0_13, %c0_14, %c0_15, %c0_16], %33 {strides = array<i32>} : memref<1x4x8x8xbf16, #tpu.memory_space<vmem>>, vector<1x1x8x8xbf16>,
    %34 = vector.extract_strided_slice %29 {offsets = [0, 32], sizes = [8, 8], strides = [1, 1]} : vector<8x96xbf16> to vector<8x8xbf16>
    %c0_17 = arith.constant 0 : index
    %c0_18 = arith.constant 0 : index
    %c0_19 = arith.constant 0 : index
    %c0_20 = arith.constant 0 : index
    %35 = vector.load %arg7[%c0_17, %c0_18, %c0_19, %c0_20] : memref<1x4x8x8xbf16, #tpu.memory_space<vmem>>, vector<1x1x8x8xbf16>
    %36 = vector.shape_cast %35 : vector<1x1x8x8xbf16> to vector<8x8xbf16>
    %37 = vector.shape_cast %34 : vector<8x8xbf16> to vector<1x1x8x8xbf16>
    tpu.vector_store %arg7[%c0_17, %c0_18, %c0_19, %c0_20], %37 {strides = array<i32>} : memref<1x4x8x8xbf16, #tpu.memory_space<vmem>>, vector<1x1x8x8xbf16>,
    %38 = vector.extract_strided_slice %29 {offsets = [0, 64], sizes = [8, 8], strides = [1, 1]} : vector<8x96xbf16> to vector<8x8xbf16>
    %c0_21 = arith.constant 0 : index
    %c0_22 = arith.constant 0 : index
    %c0_23 = arith.constant 0 : index
    %c0_24 = arith.constant 0 : index
    %39 = vector.load %arg8[%c0_21, %c0_22, %c0_23, %c0_24] : memref<1x4x8x8xbf16, #tpu.memory_space<vmem>>, vector<1x1x8x8xbf16>
    %40 = vector.shape_cast %39 : vector<1x1x8x8xbf16> to vector<8x8xbf16>
    %41 = vector.shape_cast %38 : vector<8x8xbf16> to vector<1x1x8x8xbf16>
    tpu.vector_store %arg8[%c0_21, %c0_22, %c0_23, %c0_24], %41 {strides = array<i32>} : memref<1x4x8x8xbf16, #tpu.memory_space<vmem>>, vector<1x1x8x8xbf16>,
    %42 = vector.extract_strided_slice %29 {offsets = [0, 8], sizes = [8, 8], strides = [1, 1]} : vector<8x96xbf16> to vector<8x8xbf16>
    %c0_25 = arith.constant 0 : index
    %c1 = arith.constant 1 : index
    %c0_26 = arith.constant 0 : index
    %c0_27 = arith.constant 0 : index
    %43 = vector.load %arg6[%c0_25, %c1, %c0_26, %c0_27] : memref<1x4x8x8xbf16, #tpu.memory_space<vmem>>, vector<1x1x8x8xbf16>
    %44 = vector.shape_cast %43 : vector<1x1x8x8xbf16> to vector<8x8xbf16>
    %45 = vector.shape_cast %42 : vector<8x8xbf16> to vector<1x1x8x8xbf16>
    tpu.vector_store %arg6[%c0_25, %c1, %c0_26, %c0_27], %45 {strides = array<i32>} : memref<1x4x8x8xbf16, #tpu.memory_space<vmem>>, vector<1x1x8x8xbf16>,
    %46 = vector.extract_strided_slice %29 {offsets = [0, 40], sizes = [8, 8], strides = [1, 1]} : vector<8x96xbf16> to vector<8x8xbf16>
    %c0_28 = arith.constant 0 : index
    %c1_29 = arith.constant 1 : index
    %c0_30 = arith.constant 0 : index
    %c0_31 = arith.constant 0 : index
    %47 = vector.load %arg7[%c0_28, %c1_29, %c0_30, %c0_31] : memref<1x4x8x8xbf16, #tpu.memory_space<vmem>>, vector<1x1x8x8xbf16>
    %48 = vector.shape_cast %47 : vector<1x1x8x8xbf16> to vector<8x8xbf16>
    %49 = vector.shape_cast %46 : vector<8x8xbf16> to vector<1x1x8x8xbf16>
    tpu.vector_store %arg7[%c0_28, %c1_29, %c0_30, %c0_31], %49 {strides = array<i32>} : memref<1x4x8x8xbf16, #tpu.memory_space<vmem>>, vector<1x1x8x8xbf16>,
    %50 = vector.extract_strided_slice %29 {offsets = [0, 72], sizes = [8, 8], strides = [1, 1]} : vector<8x96xbf16> to vector<8x8xbf16>
    %c0_32 = arith.constant 0 : index
    %c1_33 = arith.constant 1 : index
    %c0_34 = arith.constant 0 : index
    %c0_35 = arith.constant 0 : index
    %51 = vector.load %arg8[%c0_32, %c1_33, %c0_34, %c0_35] : memref<1x4x8x8xbf16, #tpu.memory_space<vmem>>, vector<1x1x8x8xbf16>
    %52 = vector.shape_cast %51 : vector<1x1x8x8xbf16> to vector<8x8xbf16>
    %53 = vector.shape_cast %50 : vector<8x8xbf16> to vector<1x1x8x8xbf16>
    tpu.vector_store %arg8[%c0_32, %c1_33, %c0_34, %c0_35], %53 {strides = array<i32>} : memref<1x4x8x8xbf16, #tpu.memory_space<vmem>>, vector<1x1x8x8xbf16>,
    %54 = vector.extract_strided_slice %29 {offsets = [0, 16], sizes = [8, 8], strides = [1, 1]} : vector<8x96xbf16> to vector<8x8xbf16>
    %c0_36 = arith.constant 0 : index
    %c2 = arith.constant 2 : index
    %c0_37 = arith.constant 0 : index
    %c0_38 = arith.constant 0 : index
    %55 = vector.load %arg6[%c0_36, %c2, %c0_37, %c0_38] : memref<1x4x8x8xbf16, #tpu.memory_space<vmem>>, vector<1x1x8x8xbf16>
    %56 = vector.shape_cast %55 : vector<1x1x8x8xbf16> to vector<8x8xbf16>
    %57 = vector.shape_cast %54 : vector<8x8xbf16> to vector<1x1x8x8xbf16>
    tpu.vector_store %arg6[%c0_36, %c2, %c0_37, %c0_38], %57 {strides = array<i32>} : memref<1x4x8x8xbf16, #tpu.memory_space<vmem>>, vector<1x1x8x8xbf16>,
    %58 = vector.extract_strided_slice %29 {offsets = [0, 48], sizes = [8, 8], strides = [1, 1]} : vector<8x96xbf16> to vector<8x8xbf16>
    %c0_39 = arith.constant 0 : index
    %c2_40 = arith.constant 2 : index
    %c0_41 = arith.constant 0 : index
    %c0_42 = arith.constant 0 : index
    %59 = vector.load %arg7[%c0_39, %c2_40, %c0_41, %c0_42] : memref<1x4x8x8xbf16, #tpu.memory_space<vmem>>, vector<1x1x8x8xbf16>
    %60 = vector.shape_cast %59 : vector<1x1x8x8xbf16> to vector<8x8xbf16>
    %61 = vector.shape_cast %58 : vector<8x8xbf16> to vector<1x1x8x8xbf16>
    tpu.vector_store %arg7[%c0_39, %c2_40, %c0_41, %c0_42], %61 {strides = array<i32>} : memref<1x4x8x8xbf16, #tpu.memory_space<vmem>>, vector<1x1x8x8xbf16>,
    %62 = vector.extract_strided_slice %29 {offsets = [0, 80], sizes = [8, 8], strides = [1, 1]} : vector<8x96xbf16> to vector<8x8xbf16>
    %c0_43 = arith.constant 0 : index
    %c2_44 = arith.constant 2 : index
    %c0_45 = arith.constant 0 : index
    %c0_46 = arith.constant 0 : index
    %63 = vector.load %arg8[%c0_43, %c2_44, %c0_45, %c0_46] : memref<1x4x8x8xbf16, #tpu.memory_space<vmem>>, vector<1x1x8x8xbf16>
    %64 = vector.shape_cast %63 : vector<1x1x8x8xbf16> to vector<8x8xbf16>
    %65 = vector.shape_cast %62 : vector<8x8xbf16> to vector<1x1x8x8xbf16>
    tpu.vector_store %arg8[%c0_43, %c2_44, %c0_45, %c0_46], %65 {strides = array<i32>} : memref<1x4x8x8xbf16, #tpu.memory_space<vmem>>, vector<1x1x8x8xbf16>,
    %66 = vector.extract_strided_slice %29 {offsets = [0, 24], sizes = [8, 8], strides = [1, 1]} : vector<8x96xbf16> to vector<8x8xbf16>
    %c0_47 = arith.constant 0 : index
    %c3 = arith.constant 3 : index
    %c0_48 = arith.constant 0 : index
    %c0_49 = arith.constant 0 : index
    %67 = vector.load %arg6[%c0_47, %c3, %c0_48, %c0_49] : memref<1x4x8x8xbf16, #tpu.memory_space<vmem>>, vector<1x1x8x8xbf16>
    %68 = vector.shape_cast %67 : vector<1x1x8x8xbf16> to vector<8x8xbf16>
    %69 = vector.shape_cast %66 : vector<8x8xbf16> to vector<1x1x8x8xbf16>
    tpu.vector_store %arg6[%c0_47, %c3, %c0_48, %c0_49], %69 {strides = array<i32>} : memref<1x4x8x8xbf16, #tpu.memory_space<vmem>>, vector<1x1x8x8xbf16>,
    %70 = vector.extract_strided_slice %29 {offsets = [0, 56], sizes = [8, 8], strides = [1, 1]} : vector<8x96xbf16> to vector<8x8xbf16>
    %c0_50 = arith.constant 0 : index
    %c3_51 = arith.constant 3 : index
    %c0_52 = arith.constant 0 : index
    %c0_53 = arith.constant 0 : index
    %71 = vector.load %arg7[%c0_50, %c3_51, %c0_52, %c0_53] : memref<1x4x8x8xbf16, #tpu.memory_space<vmem>>, vector<1x1x8x8xbf16>
    %72 = vector.shape_cast %71 : vector<1x1x8x8xbf16> to vector<8x8xbf16>
    %73 = vector.shape_cast %70 : vector<8x8xbf16> to vector<1x1x8x8xbf16>
    tpu.vector_store %arg7[%c0_50, %c3_51, %c0_52, %c0_53], %73 {strides = array<i32>} : memref<1x4x8x8xbf16, #tpu.memory_space<vmem>>, vector<1x1x8x8xbf16>,
    %74 = vector.extract_strided_slice %29 {offsets = [0, 88], sizes = [8, 8], strides = [1, 1]} : vector<8x96xbf16> to vector<8x8xbf16>
    %c0_54 = arith.constant 0 : index
    %c3_55 = arith.constant 3 : index
    %c0_56 = arith.constant 0 : index
    %c0_57 = arith.constant 0 : index
    %75 = vector.load %arg8[%c0_54, %c3_55, %c0_56, %c0_57] : memref<1x4x8x8xbf16, #tpu.memory_space<vmem>>, vector<1x1x8x8xbf16>
    %76 = vector.shape_cast %75 : vector<1x1x8x8xbf16> to vector<8x8xbf16>
    %77 = vector.shape_cast %74 : vector<8x8xbf16> to vector<1x1x8x8xbf16>
    tpu.vector_store %arg8[%c0_54, %c3_55, %c0_56, %c0_57], %77 {strides = array<i32>} : memref<1x4x8x8xbf16, #tpu.memory_space<vmem>>, vector<1x1x8x8xbf16>,
    return
  }
  func.func @transform_0(%arg0: i32, %arg1: i32) -> (i32, i32, i32) {
    %c0_i32 = arith.constant 0 : i32
    %c0_i32_0 = arith.constant 0 : i32
    return %arg0, %arg1, %c0_i32 : i32, i32, i32
  }
  func.func @transform_1(%arg0: i32, %arg1: i32) -> (i32, i32) {
    %c0_i32 = arith.constant 0 : i32
    %c0_i32_0 = arith.constant 0 : i32
    %c0_i32_1 = arith.constant 0 : i32
    return %c0_i32, %c0_i32_0 : i32, i32
  }
  func.func @transform_2(%arg0: i32, %arg1: i32) -> (i32, i32) {
    %c0_i32 = arith.constant 0 : i32
    %c0_i32_0 = arith.constant 0 : i32
    %c0_i32_1 = arith.constant 0 : i32
    return %c0_i32, %c0_i32_0 : i32, i32
  }
  func.func @transform_3(%arg0: i32, %arg1: i32) -> (i32, i32) {
    %c0_i32 = arith.constant 0 : i32
    %c0_i32_0 = arith.constant 0 : i32
    %c0_i32_1 = arith.constant 0 : i32
    return %c0_i32, %c0_i32_0 : i32, i32
  }
  func.func @transform_4(%arg0: i32, %arg1: i32) -> (i32, i32, i32, i32) {
    %c0_i32 = arith.constant 0 : i32
    %c0_i32_0 = arith.constant 0 : i32
    %c0_i32_1 = arith.constant 0 : i32
    return %arg0, %c0_i32, %arg1, %c0_i32_0 : i32, i32, i32, i32
  }
  func.func @transform_5(%arg0: i32, %arg1: i32) -> (i32, i32, i32, i32) {
    %c0_i32 = arith.constant 0 : i32
    %c0_i32_0 = arith.constant 0 : i32
    %c0_i32_1 = arith.constant 0 : i32
    return %arg0, %c0_i32, %arg1, %c0_i32_0 : i32, i32, i32, i32
  }
  func.func @transform_6(%arg0: i32, %arg1: i32) -> (i32, i32, i32, i32) {
    %c0_i32 = arith.constant 0 : i32
    %c0_i32_0 = arith.constant 0 : i32
    %c0_i32_1 = arith.constant 0 : i32
    return %arg0, %c0_i32, %arg1, %c0_i32_0 : i32, i32, i32, i32
  }
}

</mosaic_0001>

<llo_original>
// kernel: tpu_custom_call.1
$region0: #{tpu_custom_call.1}
  #allocation0 [shape = 'u32[]', space=smem, size = 0x4, offset = 0x4, fixed_abs, tag = 'smem constant byte address 0x4 - core index']
  #allocation1 [shape = 'u32[144,128]{1,0:T(1,128)}', space=vmem, size = 0x12000, scoped, tag = 'internal scratch']
  %s0 = inlined_call_operand.hbm [shape: f32[16,128], index: 0, kind: input, shape index: {}]
  %s1 = inlined_call_operand.hbm [shape: f32[16,128], index: 1, kind: output, shape index: {}]
  %s2 = sld [smem:[#allocation0]]
  $region41: #{tpu_custom_call.1} parent=0
    _
  %s4 = ssub.s32 1, %s2
  %s5 = scalar_select 0, %s4, %s2
  $region1: #{tpu_custom_call.1} parent=0
    #allocation2 [shape = 'u8[4096]{0}', space=vmem, size = 0x1000, scoped, tag = 'input window, operand 0, single buffered']
    #allocation3 [shape = 's32[2]{0}', space=sflag, size = 0x8, scoped, tag = 'scoped memory for tpu_custom_call.1']
    #allocation4 [shape = 's32[2]{0}', space=sflag, size = 0x8, scoped, tag = 'scoped memory for tpu_custom_call.1']
    #allocation5 [shape = 'u8[8192]{0}', space=vmem, size = 0x2000, scoped, tag = 'output window, operand 0']
    %6 = vsyncpa [#allocation3], 0
    %7 = vsyncpa [#allocation4], 0
    %s8 = scalar_lea.sflag [#allocation4], 1
    %9 = vsyncpa %s8, 0
    loop: start=0, step=1, limit=4
    $region2: #{tpu_custom_call.1} parent=1 // loop_pre_header
      _
    $region3: #{tpu_custom_call.1} parent=1 // loop_header
      %s11 = sphi 0, %s15
      %p12 = scmp.ge.s32.totalorder %s11, 4
      %s21 = sphi 0, %s23
      %s24 = sphi 0, %s21
      %s25 = sphi 0, %s24
      %s41 = sphi 0, %s25
      %s47 = sphi 0, %s49
      %s50 = sphi 0, %s47
      %s51 = sphi 0, %s50
      %s67 = sphi 0, %s51
    $region4: #{tpu_custom_call.1} parent=1 // loop_header_branch
      %14 = sbr.rel (%p12) target = $region8
    $region5: #{tpu_custom_call.1} parent=1 // loop_body
      %s16 = ssub.s32 %s11, 1
      %s17 = ssub.s32 %s11, 2
      %s18 = sadd.s32 %s11, 1
      %s19 = ssub.s32 %s11, %s18
      %p20 = scmp.eq.s32.totalorder %s19, 0
      %s22 = sadd.s32 %s21, 1
      %s23 = scalar_select %p20, %s21, %s22
      %p26 = pneg %p20
      %p27 = scmp.eq.s32.totalorder %s11, 1
      %p28 = por %p26, %p27
      %p29 = scmp.ne.s32.totalorder %s21, %s24
      %p30 = scmp.eq.s32.totalorder %s11, 0
      %p31 = por %p29, %p30
      %p32 = scmp.ne.s32.totalorder %s21, %s24
      %p33 = scmp.eq.s32.totalorder %s16, 1
      %p34 = por %p32, %p33
      %p35 = scmp.ne.s32.totalorder %s24, %s25
      %p36 = scmp.eq.s32.totalorder %s16, 0
      %p37 = por %p35, %p36
      %p38 = scmp.ne.s32.totalorder %s24, %s25
      %p39 = scmp.eq.s32.totalorder %s17, 1
      %p40 = por %p38, %p39
      %p42 = scmp.ne.s32.totalorder %s25, %s41
      %p43 = scmp.eq.s32.totalorder %s17, 0
      %p44 = por %p42, %p43
      %s45 = ssub.s32 %s11, %s18
      %p46 = scmp.eq.s32.totalorder %s45, 0
      %s48 = sadd.s32 %s47, 1
      %s49 = scalar_select %p46, %s47, %s48
      %p52 = pneg %p46
      %p53 = scmp.eq.s32.totalorder %s11, 1
      %p54 = por %p52, %p53
      %p55 = scmp.ne.s32.totalorder %s47, %s50
      %p56 = scmp.eq.s32.totalorder %s11, 0
      %p57 = por %p55, %p56
      %p58 = scmp.ne.s32.totalorder %s47, %s50
      %p59 = scmp.eq.s32.totalorder %s16, 1
      %p60 = por %p58, %p59
      %p61 = scmp.ne.s32.totalorder %s50, %s51
      %p62 = scmp.eq.s32.totalorder %s16, 0
      %p63 = por %p61, %p62
      %p64 = scmp.ne.s32.totalorder %s50, %s51
      %p65 = scmp.eq.s32.totalorder %s17, 1
      %p66 = por %p64, %p65
      %p68 = scmp.ne.s32.totalorder %s51, %s67
      %p69 = scmp.eq.s32.totalorder %s17, 0
      %p70 = por %p68, %p69
      %p71 = scmp.le.s32.totalorder 1, %s11
      %p72 = scmp.lt.s32.totalorder %s11, 3
      %p73 = pnand %p71, %p72
      %p74 = pneg %p73
      // Predicated region
      $region9: #{tpu_custom_call.1} parent=5 // pred_check
        _
      $region10: #{tpu_custom_call.1} parent=5 // pred_check_branch
        %76 = sbr.rel (%p73) target = $region12
      $region11: #{tpu_custom_call.1} parent=5 // pred_region
        %s77 = ssub.s32 %s11, 1
        // Predicated region
        $region13: #{tpu_custom_call.1} parent=11 // pred_check
          %p78 = pneg %p37
        $region14: #{tpu_custom_call.1} parent=11 // pred_check_branch
          %80 = sbr.rel (%p78) target = $region16
        $region15: #{tpu_custom_call.1} parent=11 // pred_region
          %s82 = ssub.s32 128, 128
          %83 = vsyncadd [#allocation3], %s82
          %s84 = smul.addr %s16, 128
          %s85 = scalar_lea.hbm %s0, %s84
          %s87 = sshll.u32 [#allocation2], 4
          %s88 = int_to_ptr.vmem [resolvable:$true] %s87
          %90 = dma.hbm_to_vmem [thread:$0]  %s85, 128, %s88, [#allocation3]
        $region16: #{tpu_custom_call.1} parent=11 // pred_fallthru
          _
      $region12: #{tpu_custom_call.1} parent=5 // pred_fallthru
        _
      %p91 = scmp.lt.s32.totalorder %s11, 2
      // Predicated region
      $region17: #{tpu_custom_call.1} parent=5 // pred_check
        %p92 = pneg %p91
      $region18: #{tpu_custom_call.1} parent=5 // pred_check_branch
        %94 = sbr.rel (%p92) target = $region20
      $region19: #{tpu_custom_call.1} parent=5 // pred_region
        _
      $region20: #{tpu_custom_call.1} parent=5 // pred_fallthru
        _
      %p95 = scmp.le.s32.totalorder 1, %s11
      %p96 = scmp.lt.s32.totalorder %s11, 3
      %p97 = pnand %p95, %p96
      %p98 = pneg %p97
      // Predicated region
      $region21: #{tpu_custom_call.1} parent=5 // pred_check
        _
      $region22: #{tpu_custom_call.1} parent=5 // pred_check_branch
        %100 = sbr.rel (%p97) target = $region24
      $region23: #{tpu_custom_call.1} parent=5 // pred_region
        %s101 = ssub.s32 %s11, 1
        // Predicated region
        $region25: #{tpu_custom_call.1} parent=23 // pred_check
          %p102 = pneg %p37
        $region26: #{tpu_custom_call.1} parent=23 // pred_check_branch
          %104 = sbr.rel (%p102) target = $region28
        $region27: #{tpu_custom_call.1} parent=23 // pred_region
          %105 = dma.done [#allocation3], 128
        $region28: #{tpu_custom_call.1} parent=23 // pred_fallthru
          _
        %p106 = pneg %p37
        %p107 = pneg %p34
        %p108 = pneg %p63
        %p109 = pneg %p60
        %s110 = sand.u32 %s50, 1
        %s111 = scalar_lea.sflag [#allocation4], %s110
        %s112 = sand.u32 %s50, 1
        %s113 = smul.addr %s112, 8
        %s114 = scalar_lea.vmem [#allocation5], %s113
        %v115 = vld [vmem:[#allocation2] sm:$0xff]
        %v116 = vadd.f32 %v115, 1.0
        %117 = vst [vmem:[%s114] sm:$0xff] %v116
        %s118 = sand.u32 %s50, 1
        %s119 = scalar_lea.sflag [#allocation4], %s118
        %s120 = sand.u32 %s50, 1
        %s121 = smul.addr %s120, 8
        %s122 = scalar_lea.vmem [#allocation5], %s121
        // Predicated region
        $region29: #{tpu_custom_call.1} parent=23 // pred_check
          %p123 = pneg %p60
        $region30: #{tpu_custom_call.1} parent=23 // pred_check_branch
          %125 = sbr.rel (%p123) target = $region32
        $region31: #{tpu_custom_call.1} parent=23 // pred_region
          %s127 = ssub.s32 128, 128
          %128 = vsyncadd %s119, %s127
          %s129 = smul.addr %s16, 128
          %s130 = scalar_lea.hbm %s1, %s129
          %s132 = sshll.u32 %s122, 4
          %s133 = int_to_ptr.vmem [resolvable:$true] %s132
          %135 = dma.vmem_to_hbm [thread:$0]  %s133, 128, %s130, %s119
        $region32: #{tpu_custom_call.1} parent=23 // pred_fallthru
          _
      $region24: #{tpu_custom_call.1} parent=5 // pred_fallthru
        _
      %p136 = scmp.le.s32.totalorder 2, %s11
      // Predicated region
      $region33: #{tpu_custom_call.1} parent=5 // pred_check
        %p137 = pneg %p136
      $region34: #{tpu_custom_call.1} parent=5 // pred_check_branch
        %139 = sbr.rel (%p137) target = $region36
      $region35: #{tpu_custom_call.1} parent=5 // pred_region
        %s140 = ssub.s32 %s11, 2
        // Predicated region
        $region37: #{tpu_custom_call.1} parent=35 // pred_check
          %p141 = pneg %p66
        $region38: #{tpu_custom_call.1} parent=35 // pred_check_branch
          %143 = sbr.rel (%p141) target = $region40
        $region39: #{tpu_custom_call.1} parent=35 // pred_region
          %s144 = sand.u32 %s51, 1
          %s145 = scalar_lea.sflag [#allocation4], %s144
          %s146 = sand.u32 %s51, 1
          %s147 = smul.addr %s146, 8
          %s148 = scalar_lea.vmem [#allocation5], %s147
          %149 = dma.done %s145, 128
        $region40: #{tpu_custom_call.1} parent=35 // pred_fallthru
          _
      $region36: #{tpu_custom_call.1} parent=5 // pred_fallthru
        _
    $region6: #{tpu_custom_call.1} parent=1 // loop_footer
      %s15 = sadd.s32 1, %s11
    $region7: #{tpu_custom_call.1} parent=1 // loop_footer_branch
      %10 = sbr.rel target = $region3
    $region8: #{tpu_custom_call.1} parent=1 // loop_exit
      _
    %150 = vsyncpa [#allocation3], 1
    %s151 = scalar_lea.sflag [#allocation3], 1
    %152 = vsyncpa %s151, 1
    %153 = vsyncpa [#allocation4], 1
    %s154 = scalar_lea.sflag [#allocation4], 1
    %155 = vsyncpa %s154, 1

// kernel: tpu_custom_call.1
$region0: #{tpu_custom_call.1}
  #allocation0 [shape = 'u32[]', space=smem, size = 0x4, offset = 0x4, fixed_abs, tag = 'smem constant byte address 0x4 - core index']
  #allocation1 [shape = 'u32[144,128]{1,0:T(1,128)}', space=vmem, size = 0x12000, scoped, tag = 'internal scratch']
  %s0 = inlined_call_operand.hbm [shape: f32[2,8,32], index: 0, kind: input, shape index: {}]
  %s1 = inlined_call_operand.vmem [shape: f32[1,32], index: 1, kind: input, shape index: {}]
  %s2 = inlined_call_operand.vmem [shape: f32[1,32], index: 2, kind: input, shape index: {}]
  %s3 = inlined_call_operand.hbm [shape: bf16[32,96], index: 3, kind: input, shape index: {}]
  %s4 = inlined_call_operand.hbm [shape: bf16[2,4,8,8], index: 4, kind: output, shape index: {0}]
  %s5 = inlined_call_operand.hbm [shape: bf16[2,4,8,8], index: 5, kind: output, shape index: {1}]
  %s6 = inlined_call_operand.hbm [shape: bf16[2,4,8,8], index: 6, kind: output, shape index: {2}]
  %7 = xla_tuple %s4, %s5, %s6
  %s8 = sld [smem:[#allocation0]]
  $region73: #{tpu_custom_call.1} parent=0
    _
  %s10 = ssub.s32 1, %s8
  %s11 = scalar_select 0, %s10, %s8
  $region1: #{tpu_custom_call.1} parent=0
    #allocation2 [shape = 'u8[8192]{0}', space=vmem, size = 0x2000, scoped, tag = 'input window, operand 0']
    #allocation3 [shape = 's32[2]{0}', space=sflag, size = 0x8, scoped, tag = 'scoped memory for tpu_custom_call.1']
    #allocation4 [shape = 's32[2]{0}', space=sflag, size = 0x8, scoped, tag = 'scoped memory for tpu_custom_call.1']
    #allocation5 [shape = 'u8[8192]{0}', space=vmem, size = 0x2000, scoped, tag = 'input window, operand 3, single buffered']
    #allocation6 [shape = 's32[1]{0}', space=sflag, size = 0x4, scoped, tag = 'scoped memory for tpu_custom_call.1']
    #allocation7 [shape = 'u8[16384]{0}', space=vmem, size = 0x4000, scoped, tag = 'output window, operand 0']
    #allocation8 [shape = 'u8[16384]{0}', space=vmem, size = 0x4000, scoped, tag = 'output window, operand 1']
    #allocation9 [shape = 's32[2]{0}', space=sflag, size = 0x8, scoped, tag = 'scoped memory for tpu_custom_call.1']
    #allocation10 [shape = 'u8[16384]{0}', space=vmem, size = 0x4000, scoped, tag = 'output window, operand 2']
    %12 = vsyncpa [#allocation3], 0
    %s13 = scalar_lea.sflag [#allocation3], 1
    %14 = vsyncpa %s13, 0
    %15 = vsyncpa [#allocation6], 0
    %16 = vsyncpa [#allocation4], 0
    %s17 = scalar_lea.sflag [#allocation4], 1
    %18 = vsyncpa %s17, 0
    %19 = vsyncpa [#allocation9], 0
    %s20 = scalar_lea.sflag [#allocation9], 1
    %21 = vsyncpa %s20, 0
    loop: start=0, step=1, limit=4
    $region2: #{tpu_custom_call.1} parent=1 // loop_pre_header
      _
    $region3: #{tpu_custom_call.1} parent=1 // loop_header
      %s23 = sphi 0, %s27
      %p24 = scmp.ge.s32.totalorder %s23, 4
      %s30 = sphi 0, %s42
      %s31 = sphi 0, %s38
      %s32 = sphi 0, %s30
      %s33 = sphi 0, %s31
      %s34 = sphi 0, %s32
      %s35 = sphi 0, %s33
      %s47 = sphi 0, %s49
      %s50 = sphi 0, %s47
      %s51 = sphi 0, %s50
      %s67 = sphi 0, %s51
      %s71 = sphi 0, %s71
      %s73 = sphi 0, %s71
      %s74 = sphi 0, %s73
      %s88 = sphi 0, %s74
      %s92 = sphi 0, %s92
      %s94 = sphi 0, %s92
      %s95 = sphi 0, %s94
      %s109 = sphi 0, %s95
      %s113 = sphi 0, %s113
      %s115 = sphi 0, %s113
      %s116 = sphi 0, %s115
      %s130 = sphi 0, %s116
      %s138 = sphi 0, %s140
      %s141 = sphi 0, %s138
      %s142 = sphi 0, %s141
      %s158 = sphi 0, %s142
      %s166 = sphi 0, %s168
      %s169 = sphi 0, %s166
      %s170 = sphi 0, %s169
      %s186 = sphi 0, %s170
      %s194 = sphi 0, %s196
      %s197 = sphi 0, %s194
      %s198 = sphi 0, %s197
      %s214 = sphi 0, %s198
    $region4: #{tpu_custom_call.1} parent=1 // loop_header_branch
      %26 = sbr.rel (%p24) target = $region8
    $region5: #{tpu_custom_call.1} parent=1 // loop_body
      %s28 = ssub.s32 %s23, 1
      %s29 = ssub.s32 %s23, 2
      %s36 = sadd.s32 1, %s31
      %p37 = scmp.ge.s32.totalorder %s36, 1
      %s38 = scalar_select %p37, 0, %s36
      %s39 = sadd.s32 1, %s30
      %s40 = scalar_select %p37, %s39, %s30
      %p41 = scmp.ge.s32.totalorder %s40, 2
      %s42 = scalar_select %p41, 0, %s40
      %s43 = ssub.s32 %s30, %s42
      %s44 = ssub.s32 %s31, %s38
      %s45 = sor.u32 %s43, %s44
      %p46 = scmp.eq.s32.totalorder %s45, 0
      %s48 = sadd.s32 %s47, 1
      %s49 = scalar_select %p46, %s47, %s48
      %p52 = pneg %p46
      %p53 = scmp.eq.s32.totalorder %s23, 1
      %p54 = por %p52, %p53
      %p55 = scmp.ne.s32.totalorder %s47, %s50
      %p56 = scmp.eq.s32.totalorder %s23, 0
      %p57 = por %p55, %p56
      %p58 = scmp.ne.s32.totalorder %s47, %s50
      %p59 = scmp.eq.s32.totalorder %s28, 1
      %p60 = por %p58, %p59
      %p61 = scmp.ne.s32.totalorder %s50, %s51
      %p62 = scmp.eq.s32.totalorder %s28, 0
      %p63 = por %p61, %p62
      %p64 = scmp.ne.s32.totalorder %s50, %s51
      %p65 = scmp.eq.s32.totalorder %s29, 1
      %p66 = por %p64, %p65
      %p68 = scmp.ne.s32.totalorder %s51, %s67
      %p69 = scmp.eq.s32.totalorder %s29, 0
      %p70 = por %p68, %p69
      %s72 = sadd.s32 %s71, 1
      %p75 = scmp.eq.s32.totalorder %s23, 1
      %p76 = scmp.ne.s32.totalorder %s71, %s73
      %p77 = scmp.eq.s32.totalorder %s23, 0
      %p78 = por %p76, %p77
      %p79 = scmp.ne.s32.totalorder %s71, %s73
      %p80 = scmp.eq.s32.totalorder %s28, 1
      %p81 = por %p79, %p80
      %p82 = scmp.ne.s32.totalorder %s73, %s74
      %p83 = scmp.eq.s32.totalorder %s28, 0
      %p84 = por %p82, %p83
      %p85 = scmp.ne.s32.totalorder %s73, %s74
      %p86 = scmp.eq.s32.totalorder %s29, 1
      %p87 = por %p85, %p86
      %p89 = scmp.ne.s32.totalorder %s74, %s88
      %p90 = scmp.eq.s32.totalorder %s29, 0
      %p91 = por %p89, %p90
      %s93 = sadd.s32 %s92, 1
      %p96 = scmp.eq.s32.totalorder %s23, 1
      %p97 = scmp.ne.s32.totalorder %s92, %s94
      %p98 = scmp.eq.s32.totalorder %s23, 0
      %p99 = por %p97, %p98
      %p100 = scmp.ne.s32.totalorder %s92, %s94
      %p101 = scmp.eq.s32.totalorder %s28, 1
      %p102 = por %p100, %p101
      %p103 = scmp.ne.s32.totalorder %s94, %s95
      %p104 = scmp.eq.s32.totalorder %s28, 0
      %p105 = por %p103, %p104
      %p106 = scmp.ne.s32.totalorder %s94, %s95
      %p107 = scmp.eq.s32.totalorder %s29, 1
      %p108 = por %p106, %p107
      %p110 = scmp.ne.s32.totalorder %s95, %s109
      %p111 = scmp.eq.s32.totalorder %s29, 0
      %p112 = por %p110, %p111
      %s114 = sadd.s32 %s113, 1
      %p117 = scmp.eq.s32.totalorder %s23, 1
      %p118 = scmp.ne.s32.totalorder %s113, %s115
      %p119 = scmp.eq.s32.totalorder %s23, 0
      %p120 = por %p118, %p119
      %p121 = scmp.ne.s32.totalorder %s113, %s115
      %p122 = scmp.eq.s32.totalorder %s28, 1
      %p123 = por %p121, %p122
      %p124 = scmp.ne.s32.totalorder %s115, %s116
      %p125 = scmp.eq.s32.totalorder %s28, 0
      %p126 = por %p124, %p125
      %p127 = scmp.ne.s32.totalorder %s115, %s116
      %p128 = scmp.eq.s32.totalorder %s29, 1
      %p129 = por %p127, %p128
      %p131 = scmp.ne.s32.totalorder %s116, %s130
      %p132 = scmp.eq.s32.totalorder %s29, 0
      %p133 = por %p131, %p132
      %s134 = ssub.s32 %s30, %s42
      %s135 = ssub.s32 %s31, %s38
      %s136 = sor.u32 %s134, %s135
      %p137 = scmp.eq.s32.totalorder %s136, 0
      %s139 = sadd.s32 %s138, 1
      %s140 = scalar_select %p137, %s138, %s139
      %p143 = pneg %p137
      %p144 = scmp.eq.s32.totalorder %s23, 1
      %p145 = por %p143, %p144
      %p146 = scmp.ne.s32.totalorder %s138, %s141
      %p147 = scmp.eq.s32.totalorder %s23, 0
      %p148 = por %p146, %p147
      %p149 = scmp.ne.s32.totalorder %s138, %s141
      %p150 = scmp.eq.s32.totalorder %s28, 1
      %p151 = por %p149, %p150
      %p152 = scmp.ne.s32.totalorder %s141, %s142
      %p153 = scmp.eq.s32.totalorder %s28, 0
      %p154 = por %p152, %p153
      %p155 = scmp.ne.s32.totalorder %s141, %s142
      %p156 = scmp.eq.s32.totalorder %s29, 1
      %p157 = por %p155, %p156
      %p159 = scmp.ne.s32.totalorder %s142, %s158
      %p160 = scmp.eq.s32.totalorder %s29, 0
      %p161 = por %p159, %p160
      %s162 = ssub.s32 %s30, %s42
      %s163 = ssub.s32 %s31, %s38
      %s164 = sor.u32 %s162, %s163
      %p165 = scmp.eq.s32.totalorder %s164, 0
      %s167 = sadd.s32 %s166, 1
      %s168 = scalar_select %p165, %s166, %s167
      %p171 = pneg %p165
      %p172 = scmp.eq.s32.totalorder %s23, 1
      %p173 = por %p171, %p172
      %p174 = scmp.ne.s32.totalorder %s166, %s169
      %p175 = scmp.eq.s32.totalorder %s23, 0
      %p176 = por %p174, %p175
      %p177 = scmp.ne.s32.totalorder %s166, %s169
      %p178 = scmp.eq.s32.totalorder %s28, 1
      %p179 = por %p177, %p178
      %p180 = scmp.ne.s32.totalorder %s169, %s170
      %p181 = scmp.eq.s32.totalorder %s28, 0
      %p182 = por %p180, %p181
      %p183 = scmp.ne.s32.totalorder %s169, %s170
      %p184 = scmp.eq.s32.totalorder %s29, 1
      %p185 = por %p183, %p184
      %p187 = scmp.ne.s32.totalorder %s170, %s186
      %p188 = scmp.eq.s32.totalorder %s29, 0
      %p189 = por %p187, %p188
      %s190 = ssub.s32 %s30, %s42
      %s191 = ssub.s32 %s31, %s38
      %s192 = sor.u32 %s190, %s191
      %p193 = scmp.eq.s32.totalorder %s192, 0
      %s195 = sadd.s32 %s194, 1
      %s196 = scalar_select %p193, %s194, %s195
      %p199 = pneg %p193
      %p200 = scmp.eq.s32.totalorder %s23, 1
      %p201 = por %p199, %p200
      %p202 = scmp.ne.s32.totalorder %s194, %s197
      %p203 = scmp.eq.s32.totalorder %s23, 0
      %p204 = por %p202, %p203
      %p205 = scmp.ne.s32.totalorder %s194, %s197
      %p206 = scmp.eq.s32.totalorder %s28, 1
      %p207 = por %p205, %p206
      %p208 = scmp.ne.s32.totalorder %s197, %s198
      %p209 = scmp.eq.s32.totalorder %s28, 0
      %p210 = por %p208, %p209
      %p211 = scmp.ne.s32.totalorder %s197, %s198
      %p212 = scmp.eq.s32.totalorder %s29, 1
      %p213 = por %p211, %p212
      %p215 = scmp.ne.s32.totalorder %s198, %s214
      %p216 = scmp.eq.s32.totalorder %s29, 0
      %p217 = por %p215, %p216
      %p218 = scmp.le.s32.totalorder 1, %s23
      %p219 = scmp.lt.s32.totalorder %s23, 3
      %p220 = pnand %p218, %p219
      %p221 = pneg %p220
      // Predicated region
      $region9: #{tpu_custom_call.1} parent=5 // pred_check
        _
      $region10: #{tpu_custom_call.1} parent=5 // pred_check_branch
        %223 = sbr.rel (%p220) target = $region12
      $region11: #{tpu_custom_call.1} parent=5 // pred_region
        %s224 = ssub.s32 %s23, 1
        // Predicated region
        $region13: #{tpu_custom_call.1} parent=11 // pred_check
          %p225 = pneg %p84
        $region14: #{tpu_custom_call.1} parent=11 // pred_check_branch
          %227 = sbr.rel (%p225) target = $region16
        $region15: #{tpu_custom_call.1} parent=11 // pred_region
          _
        $region16: #{tpu_custom_call.1} parent=11 // pred_fallthru
          _
        // Predicated region
        $region17: #{tpu_custom_call.1} parent=11 // pred_check
          %p228 = pneg %p105
        $region18: #{tpu_custom_call.1} parent=11 // pred_check_branch
          %230 = sbr.rel (%p228) target = $region20
        $region19: #{tpu_custom_call.1} parent=11 // pred_region
          _
        $region20: #{tpu_custom_call.1} parent=11 // pred_fallthru
          _
        // Predicated region
        $region21: #{tpu_custom_call.1} parent=11 // pred_check
          %p231 = pneg %p126
        $region22: #{tpu_custom_call.1} parent=11 // pred_check_branch
          %233 = sbr.rel (%p231) target = $region24
        $region23: #{tpu_custom_call.1} parent=11 // pred_region
          %s235 = ssub.s32 256, 256
          %236 = vsyncadd [#allocation6], %s235
          %s237 = sshll.u32 [#allocation5], 4
          %s238 = int_to_ptr.vmem [resolvable:$true] %s237
          %243 = dma.hbm_to_vmem [thread:$0]  %s3, 256, %s238, [#allocation6], 64, 64, 4
        $region24: #{tpu_custom_call.1} parent=11 // pred_fallthru
          _
      $region12: #{tpu_custom_call.1} parent=5 // pred_fallthru
        _
      %p244 = scmp.lt.s32.totalorder %s23, 2
      // Predicated region
      $region25: #{tpu_custom_call.1} parent=5 // pred_check
        %p245 = pneg %p244
      $region26: #{tpu_custom_call.1} parent=5 // pred_check_branch
        %247 = sbr.rel (%p245) target = $region28
      $region27: #{tpu_custom_call.1} parent=5 // pred_region
        // Predicated region
        $region29: #{tpu_custom_call.1} parent=27 // pred_check
          %p248 = pneg %p57
        $region30: #{tpu_custom_call.1} parent=27 // pred_check_branch
          %250 = sbr.rel (%p248) target = $region32
        $region31: #{tpu_custom_call.1} parent=27 // pred_region
          %s251 = sand.u32 %s47, 1
          %s252 = scalar_lea.sflag [#allocation3], %s251
          %s253 = sand.u32 %s47, 1
          %s254 = smul.addr %s253, 8
          %s255 = scalar_lea.vmem [#allocation2], %s254
          %s257 = ssub.s32 128, 128
          %258 = vsyncadd %s252, %s257
          %s259 = sadd.s32 %s31, %s30
          %s260 = smul.addr %s259, 128
          %s261 = scalar_lea.hbm %s0, %s260
          %s263 = sshll.u32 %s255, 4
          %s264 = int_to_ptr.vmem [resolvable:$true] %s263
          %266 = dma.hbm_to_vmem [thread:$0]  %s261, 128, %s264, %s252
        $region32: #{tpu_custom_call.1} parent=27 // pred_fallthru
          _
      $region28: #{tpu_custom_call.1} parent=5 // pred_fallthru
        _
      %p267 = scmp.le.s32.totalorder 1, %s23
      %p268 = scmp.lt.s32.totalorder %s23, 3
      %p269 = pnand %p267, %p268
      %p270 = pneg %p269
      // Predicated region
      $region33: #{tpu_custom_call.1} parent=5 // pred_check
        _
      $region34: #{tpu_custom_call.1} parent=5 // pred_check_branch
        %272 = sbr.rel (%p269) target = $region36
      $region35: #{tpu_custom_call.1} parent=5 // pred_region
        %s273 = ssub.s32 %s23, 1
        %s274 = sand.u32 %s50, 1
        %s275 = scalar_lea.sflag [#allocation3], %s274
        %s276 = sand.u32 %s50, 1
        %s277 = smul.addr %s276, 8
        %s278 = scalar_lea.vmem [#allocation2], %s277
        // Predicated region
        $region37: #{tpu_custom_call.1} parent=35 // pred_check
          %p279 = pneg %p63
        $region38: #{tpu_custom_call.1} parent=35 // pred_check_branch
          %281 = sbr.rel (%p279) target = $region40
        $region39: #{tpu_custom_call.1} parent=35 // pred_region
          %282 = dma.done %s275, 128
        $region40: #{tpu_custom_call.1} parent=35 // pred_fallthru
          _
        // Predicated region
        $region41: #{tpu_custom_call.1} parent=35 // pred_check
          %p283 = pneg %p126
        $region42: #{tpu_custom_call.1} parent=35 // pred_check_branch
          %285 = sbr.rel (%p283) target = $region44
        $region43: #{tpu_custom_call.1} parent=35 // pred_region
          %286 = dma.done [#allocation6], 256
        $region44: #{tpu_custom_call.1} parent=35 // pred_fallthru
          _
        %s287 = sand.u32 %s50, 1
        %s288 = scalar_lea.sflag [#allocation3], %s287
        %s289 = sand.u32 %s50, 1
        %s290 = smul.addr %s289, 8
        %s291 = scalar_lea.vmem [#allocation2], %s290
        %p292 = pneg %p63
        %p293 = pneg %p60
        %p294 = pneg %p84
        %p295 = pneg %p81
        %p296 = pneg %p105
        %p297 = pneg %p102
        %p298 = pneg %p126
        %p299 = pneg %p123
        %p300 = pneg %p154
        %p301 = pneg %p151
        %s302 = sand.u32 %s141, 1
        %s303 = scalar_lea.sflag [#allocation4], %s302
        %s304 = sand.u32 %s141, 1
        %s305 = smul.addr %s304, 16
        %s306 = scalar_lea.vmem [#allocation7], %s305
        %p307 = pneg %p182
        %p308 = pneg %p179
        %s309 = sand.u32 %s28, 1
        %s310 = scalar_lea.sflag [#allocation9], %s309
        %s311 = sand.u32 %s169, 1
        %s312 = smul.addr %s311, 16
        %s313 = scalar_lea.vmem [#allocation8], %s312
        %p314 = pneg %p210
        %p315 = pneg %p207
        %s316 = sand.u32 %s28, 1
        %s317 = scalar_lea.sflag [#allocation9], %s316
        %s318 = sand.u32 %s197, 1
        %s319 = smul.addr %s318, 16
        %s320 = scalar_lea.vmem [#allocation10], %s319
        %v322 = vld [vmem:[%s278] sm:$0xff]
        %v323 = vld [vmem:[%s1] sm:$0x1]
        %v324 = vld [vmem:[%s2] sm:$0x1]
        %vm325 = vcmask 261120
        %v326 = vsel %vm325, %v322, 0.0
        %327 = vadd.xlane.f32.xlu0 %v326
        %v328 = vpop.xlane.xlu0 %327
        %v329 = vrcp.pop 32.0
        %v330 = vmul.f32 %v328, %v329
        %v331 = vsub.f32 %v322, %v330
        %v332 = vmul.f32 %v331, %v331
        %v333 = vsel %vm325, %v332, 0.0
        %334 = vadd.xlane.f32.xlu0 %v333
        %v335 = vpop.xlane.xlu0 %334
        %v336 = vmul.f32 %v335, %v329
        %v337 = vadd.f32 %v336, 1e-05
        %v338 = vrsqrt.pop %v337
        %v339 = vmul.f32 %v331, %v338
        %v341 = vlaneseq
        %v342 = vshrl.u32 %v341, 7
        %v343 = vsub.s32 0, %v342
        %v344 = vrot.slane %v323, %v343
        %v346 = vmul.f32 %v344, %v339
        %v348 = vlaneseq
        %v349 = vshrl.u32 %v348, 7
        %v350 = vsub.s32 0, %v349
        %v351 = vrot.slane %v324, %v350
        %v353 = vadd.f32 %v346, %v351
        %v354 = vpack.c.bf16 %v353, %v353
        %v355 = vld [vmem:[#allocation5] sm:$0xf]
        %v356 = vld [vmem:[#allocation5 + $0x4] sm:$0xf]
        %v357 = vld [vmem:[#allocation5 + $0x8] sm:$0xf]
        %v358 = vld [vmem:[#allocation5 + $0xc] sm:$0xf]
        %v363 = vunpack.c.l.b16 %v355
        %v364 = vunpack.c.l.b16 %v356
        %v365 = vunpack.c.l.b16 %v357
        %v366 = vunpack.c.l.b16 %v358
        %v367 = vpack.c.b16 %v364, %v363
        %v368 = vpack.c.b16 %v366, %v365
        %v372 = vsel %vm325, %v354, 0
        %374 = vmatprep.subr.bf16.mxu0 0
        %375 = vmatpush1.bf16.msra.mxu0 %v367
        %376 = vmatprep.subr.bf16.mxu0 0
        %377 = vmatpush1.bf16.msra.mxu0 %v368
        %378 = vmatprep.subr.bf16.mxu0 0
        %379 = vmatpush1.bf16.msra.mxu0 0
        %380 = vmatprep.subr.bf16.mxu0 0
        %381 = vmatpush1.bf16.msra.mxu0 0
        %382 = vmatprep.subr.bf16.mxu0 0
        %383 = vmatpush1.bf16.msra.mxu0 0
        %384 = vmatprep.subr.bf16.mxu0 0
        %385 = vmatpush1.bf16.msra.mxu0 0
        %386 = vmatprep.subr.bf16.mxu0 0
        %387 = vmatpush1.bf16.msra.mxu0 0
        %388 = vmatprep.subr.bf16.mxu0 0
        %389 = vmatpush1.bf16.msra.mxu0 0
        %390 = vmatprep.subr.bf16.mxu0 0
        %391 = vmatpush1.bf16.msra.mxu0 0
        %392 = vmatprep.subr.bf16.mxu0 0
        %393 = vmatpush1.bf16.msra.mxu0 0
        %394 = vmatprep.subr.bf16.mxu0 0
        %395 = vmatpush1.bf16.msra.mxu0 0
        %396 = vmatprep.subr.bf16.mxu0 0
        %397 = vmatpush1.bf16.msra.mxu0 0
        %398 = vmatprep.subr.bf16.mxu0 0
        %399 = vmatpush1.bf16.msra.mxu0 0
        %400 = vmatprep.subr.bf16.mxu0 0
        %401 = vmatpush1.bf16.msra.mxu0 0
        %402 = vmatprep.subr.bf16.mxu0 0
        %403 = vmatpush1.bf16.msra.mxu0 0
        %404 = vmatprep.subr.bf16.mxu0 0
        %405 = vmatpush1.bf16.msra.mxu0 0
        %406 = vmatprep.mubr.bf16.mxu0 0
        %407 = vmatmul.mubr.bf16.gmra.mrb[0].mxu0 %v372
        %v408 = vpop.f32.mrb[0].mxu0
        %v409 = vadd.f32 0.0, %v408
        %v410 = vpop.f32.mrb[0].mxu0
        %v411 = vpop.f32.mrb[0].mxu0
        %v412 = vpop.f32.mrb[0].mxu0
        %413 = vdwg.mxu0
        %v414 = vpack.c.bf16 %v409, %v409
        %vm415 = vcmask 60416
        %416 = vst.msk [vmem:[%s306] sm:$0xf] %vm415, %v414
        %v418 = vunpack.c.l.b16 %v414
        %v419 = vpack.c.b16 %v418, %v418
        %420 = vrot.lane.b32.xlu0 %v419, 96
        %v421 = vpop.permute.xlu0 %420
        %423 = vst.msk [vmem:[%s313] sm:$0xf] %vm415, %v421
        %424 = vrot.lane.b32.xlu0 %v419, 64
        %v425 = vpop.permute.xlu0 %424
        %427 = vst.msk [vmem:[%s320] sm:$0xf] %vm415, %v425
        %428 = vrot.lane.b32.xlu0 %v419, 120
        %v429 = vpop.permute.xlu0 %428
        %s431 = scalar_lea.vmem %s306, 4 [#allocation7]
        %432 = vst.msk [vmem:[%s431] sm:$0xf] %vm415, %v429
        %433 = vrot.lane.b32.xlu0 %v419, 88
        %v434 = vpop.permute.xlu0 %433
        %s436 = scalar_lea.vmem %s313, 4 [#allocation8]
        %437 = vst.msk [vmem:[%s436] sm:$0xf] %vm415, %v434
        %438 = vrot.lane.b32.xlu0 %v419, 56
        %v439 = vpop.permute.xlu0 %438
        %s441 = scalar_lea.vmem %s320, 4 [#allocation10]
        %442 = vst.msk [vmem:[%s441] sm:$0xf] %vm415, %v439
        %443 = vrot.lane.b32.xlu0 %v419, 112
        %v444 = vpop.permute.xlu0 %443
        %s446 = scalar_lea.vmem %s306, 8 [#allocation7]
        %447 = vst.msk [vmem:[%s446] sm:$0xf] %vm415, %v444
        %448 = vrot.lane.b32.xlu0 %v419, 80
        %v449 = vpop.permute.xlu0 %448
        %s451 = scalar_lea.vmem %s313, 8 [#allocation8]
        %452 = vst.msk [vmem:[%s451] sm:$0xf] %vm415, %v449
        %453 = vrot.lane.b32.xlu0 %v419, 48
        %v454 = vpop.permute.xlu0 %453
        %s456 = scalar_lea.vmem %s320, 8 [#allocation10]
        %457 = vst.msk [vmem:[%s456] sm:$0xf] %vm415, %v454
        %458 = vrot.lane.b32.xlu0 %v419, 104
        %v459 = vpop.permute.xlu0 %458
        %s461 = scalar_lea.vmem %s306, 12 [#allocation7]
        %462 = vst.msk [vmem:[%s461] sm:$0xf] %vm415, %v459
        %463 = vrot.lane.b32.xlu0 %v419, 72
        %v464 = vpop.permute.xlu0 %463
        %s466 = scalar_lea.vmem %s313, 12 [#allocation8]
        %467 = vst.msk [vmem:[%s466] sm:$0xf] %vm415, %v464
        %468 = vrot.lane.b32.xlu0 %v419, 40
        %v469 = vpop.permute.xlu0 %468
        %s471 = scalar_lea.vmem %s320, 12 [#allocation10]
        %472 = vst.msk [vmem:[%s471] sm:$0xf] %vm415, %v469
        %s473 = sand.u32 %s141, 1
        %s474 = scalar_lea.sflag [#allocation4], %s473
        %s475 = sand.u32 %s141, 1
        %s476 = smul.addr %s475, 16
        %s477 = scalar_lea.vmem [#allocation7], %s476
        %s478 = sand.u32 %s28, 1
        %s479 = scalar_lea.sflag [#allocation9], %s478
        %s480 = sand.u32 %s169, 1
        %s481 = smul.addr %s480, 16
        %s482 = scalar_lea.vmem [#allocation8], %s481
        %s483 = sand.u32 %s28, 1
        %s484 = scalar_lea.sflag [#allocation9], %s483
        %s485 = sand.u32 %s197, 1
        %s486 = smul.addr %s485, 16
        %s487 = scalar_lea.vmem [#allocation10], %s486
        // Predicated region
        $region45: #{tpu_custom_call.1} parent=35 // pred_check
          %p488 = pneg %p151
        $region46: #{tpu_custom_call.1} parent=35 // pred_check_branch
          %490 = sbr.rel (%p488) target = $region48
        $region47: #{tpu_custom_call.1} parent=35 // pred_region
          %s492 = ssub.s32 256, 256
          %493 = vsyncadd %s474, %s492
          %s494 = smul.addr %s32, 4
          %s495 = sadd.s32 %s33, %s494
          %s496 = smul.addr %s495, 64
          %s497 = scalar_lea.hbm %s4, %s496
          %s498 = sshll.u32 %s477, 4
          %s499 = int_to_ptr.vmem [resolvable:$true] %s498
          %504 = dma.vmem_to_hbm [thread:$0]  %s499, 256, %s497, %s474, 64, 64, 4
        $region48: #{tpu_custom_call.1} parent=35 // pred_fallthru
          _
        // Predicated region
        $region49: #{tpu_custom_call.1} parent=35 // pred_check
          %p505 = pneg %p179
        $region50: #{tpu_custom_call.1} parent=35 // pred_check_branch
          %507 = sbr.rel (%p505) target = $region52
        $region51: #{tpu_custom_call.1} parent=35 // pred_region
          %s509 = ssub.s32 256, 256
          %510 = vsyncadd %s479, %s509
          %s511 = smul.addr %s32, 4
          %s512 = sadd.s32 %s33, %s511
          %s513 = smul.addr %s512, 64
          %s514 = scalar_lea.hbm %s5, %s513
          %s515 = sshll.u32 %s482, 4
          %s516 = int_to_ptr.vmem [resolvable:$true] %s515
          %521 = dma.vmem_to_hbm [thread:$0]  %s516, 256, %s514, %s479, 64, 64, 4
        $region52: #{tpu_custom_call.1} parent=35 // pred_fallthru
          _
        // Predicated region
        $region53: #{tpu_custom_call.1} parent=35 // pred_check
          %p522 = pneg %p207
        $region54: #{tpu_custom_call.1} parent=35 // pred_check_branch
          %524 = sbr.rel (%p522) target = $region56
        $region55: #{tpu_custom_call.1} parent=35 // pred_region
          %s526 = ssub.s32 256, 256
          %527 = vsyncadd %s484, %s526
          %s528 = smul.addr %s32, 4
          %s529 = sadd.s32 %s33, %s528
          %s530 = smul.addr %s529, 64
          %s531 = scalar_lea.hbm %s6, %s530
          %s532 = sshll.u32 %s487, 4
          %s533 = int_to_ptr.vmem [resolvable:$true] %s532
          %538 = dma.vmem_to_hbm [thread:$0]  %s533, 256, %s531, %s484, 64, 64, 4
        $region56: #{tpu_custom_call.1} parent=35 // pred_fallthru
          _
      $region36: #{tpu_custom_call.1} parent=5 // pred_fallthru
        _
      %p539 = scmp.le.s32.totalorder 2, %s23
      // Predicated region
      $region57: #{tpu_custom_call.1} parent=5 // pred_check
        %p540 = pneg %p539
      $region58: #{tpu_custom_call.1} parent=5 // pred_check_branch
        %542 = sbr.rel (%p540) target = $region60
      $region59: #{tpu_custom_call.1} parent=5 // pred_region
        %s543 = ssub.s32 %s23, 2
        // Predicated region
        $region61: #{tpu_custom_call.1} parent=59 // pred_check
          %p544 = pneg %p157
        $region62: #{tpu_custom_call.1} parent=59 // pred_check_branch
          %546 = sbr.rel (%p544) target = $region64
        $region63: #{tpu_custom_call.1} parent=59 // pred_region
          %s547 = sand.u32 %s142, 1
          %s548 = scalar_lea.sflag [#allocation4], %s547
          %s549 = sand.u32 %s142, 1
          %s550 = smul.addr %s549, 16
          %s551 = scalar_lea.vmem [#allocation7], %s550
          %552 = dma.done %s548, 256
        $region64: #{tpu_custom_call.1} parent=59 // pred_fallthru
          _
        // Predicated region
        $region65: #{tpu_custom_call.1} parent=59 // pred_check
          %p553 = pneg %p185
        $region66: #{tpu_custom_call.1} parent=59 // pred_check_branch
          %555 = sbr.rel (%p553) target = $region68
        $region67: #{tpu_custom_call.1} parent=59 // pred_region
          %s556 = sand.u32 %s29, 1
          %s557 = scalar_lea.sflag [#allocation9], %s556
          %s558 = sand.u32 %s170, 1
          %s559 = smul.addr %s558, 16
          %s560 = scalar_lea.vmem [#allocation8], %s559
          %561 = dma.done %s557, 256
        $region68: #{tpu_custom_call.1} parent=59 // pred_fallthru
          _
        // Predicated region
        $region69: #{tpu_custom_call.1} parent=59 // pred_check
          %p562 = pneg %p213
        $region70: #{tpu_custom_call.1} parent=59 // pred_check_branch
          %564 = sbr.rel (%p562) target = $region72
        $region71: #{tpu_custom_call.1} parent=59 // pred_region
          %s565 = sand.u32 %s29, 1
          %s566 = scalar_lea.sflag [#allocation9], %s565
          %s567 = sand.u32 %s198, 1
          %s568 = smul.addr %s567, 16
          %s569 = scalar_lea.vmem [#allocation10], %s568
          %570 = dma.done %s566, 256
        $region72: #{tpu_custom_call.1} parent=59 // pred_fallthru
          _
      $region60: #{tpu_custom_call.1} parent=5 // pred_fallthru
        _
    $region6: #{tpu_custom_call.1} parent=1 // loop_footer
      %s27 = sadd.s32 1, %s23
    $region7: #{tpu_custom_call.1} parent=1 // loop_footer_branch
      %22 = sbr.rel target = $region3
    $region8: #{tpu_custom_call.1} parent=1 // loop_exit
      _
    %571 = vsyncpa [#allocation3], 1
    %s572 = scalar_lea.sflag [#allocation3], 1
    %573 = vsyncpa %s572, 1
    %574 = vsyncpa [#allocation6], 1
    %575 = vsyncpa [#allocation4], 1
    %s576 = scalar_lea.sflag [#allocation4], 1
    %577 = vsyncpa %s576, 1
    %578 = vsyncpa [#allocation9], 1
    %s579 = scalar_lea.sflag [#allocation9], 1
    %580 = vsyncpa %s579, 1

</llo_original>
